<compile_context>
chip_gen: v6e
topology: v6e:2x2x1
jax: 0.10.0
libtpu: 0.0.40
codegen_flags: <defaults>
</compile_context>

<pallas_src>
import functools

import jax
import jax.numpy as jnp
from jax.experimental import pallas as pl
from jax.experimental.pallas import tpu as pltpu


def _round_up(n, m):
    return (n + m - 1) // m * m


def pack_qnet_params(params, dtype=jnp.float32):
    """Pack (w1, b1, w2, b2, w3, b3) into one [rows, 128] slab (single DMA).

    Weights are stored TRANSPOSED ([out_features, in_features]) so the kernel's
    feature-major matmuls can slice them directly; each layer occupies a
    16-row-aligned section and its bias sits in the last lane column (col 127).
    """
    w1, b1, w2, b2, w3, b3 = params      # weights given as [in, out]
    ns, nh = w1.shape
    na = w3.shape[1]
    width = 128
    assert max(ns, nh, na) < width, "feature dims must be < 128 for this packing"
    sec1 = 0
    sec2 = sec1 + _round_up(nh, 16)
    sec3 = sec2 + _round_up(nh, 16)
    rows = sec3 + _round_up(na, 16)
    bias_col = width - 1

    slab = jnp.zeros((rows, width), dtype=jnp.float32)
    slab = slab.at[sec1:sec1 + nh, 0:ns].set(w1.T)
    slab = slab.at[sec1:sec1 + nh, bias_col].set(b1.reshape(-1))
    slab = slab.at[sec2:sec2 + nh, 0:nh].set(w2.T)
    slab = slab.at[sec2:sec2 + nh, bias_col].set(b2.reshape(-1))
    slab = slab.at[sec3:sec3 + na, 0:nh].set(w3.T)
    slab = slab.at[sec3:sec3 + na, bias_col].set(b3.reshape(-1))

    layout = dict(ns=ns, nh=nh, na=na, sec1=sec1, sec2=sec2, sec3=sec3,
                  bias_col=bias_col)
    return slab.astype(dtype), layout


def _qnet_kernel(x_ref, p_ref, o_ref, *, ns, nh, na, sec1, sec2, sec3, bias_col):
    f32 = jnp.float32
    x = x_ref[...].astype(f32)                       # [ns, tb]  (batch on lanes)
    tb = x.shape[1]

    # ---- Layer 1: ns (=4) VPU broadcast FMAs; skip a K=4 (mostly padded) MXU op.
    b1 = p_ref[sec1:sec1 + nh, bias_col:bias_col + 1].astype(f32)   # [nh, 1]
    h1 = jnp.zeros((nh, tb), f32)
    for k in range(ns):                              # static unroll (ns is tiny)
        w1k = p_ref[sec1:sec1 + nh, k:k + 1].astype(f32)            # [nh, 1]
        h1 = h1 + w1k * x[k:k + 1, :]                # lane/sublane broadcasts
    h1 = jnp.maximum(h1 + b1, 0.0)                   # [nh, tb]

    # ---- Layer 2: MXU matmul, batch on the lane-dense N axis.
    w2t = p_ref[sec2:sec2 + nh, 0:nh].astype(f32)                   # [nh, nh]
    b2 = p_ref[sec2:sec2 + nh, bias_col:bias_col + 1].astype(f32)   # [nh, 1]
    h2 = jnp.dot(w2t, h1, preferred_element_type=f32) + b2
    h2 = jnp.maximum(h2, 0.0)                        # [nh, tb]

    # ---- Layer 3: pad M to a sublane multiple (extra slab rows are zero).
    mpad = _round_up(na, 8)
    w3t = p_ref[sec3:sec3 + mpad, 0:nh].astype(f32)                 # [mpad, nh]
    b3 = p_ref[sec3:sec3 + na, bias_col:bias_col + 1].astype(f32)   # [na, 1]
    logits = jnp.dot(w3t, h2, preferred_element_type=f32)[0:na, :] + b3  # [na, tb]

    # ---- Softmax over actions = SUBLANE axis (na rows): cheap, no cross-lane work.
    # Exact divide kept deliberately (stay within 1e-5 of the f32 reference).
    m = jnp.max(logits, axis=0, keepdims=True)
    e = jnp.exp(logits - m)
    o_ref[...] = (e / jnp.sum(e, axis=0, keepdims=True)).astype(o_ref.dtype)


def qnet_forward(x, packed, *, block_batch=8192):
    """Run the QNet forward pass. `packed` = pack_qnet_params(params, dtype).

    x: [batch, num_states] -> returns [batch, num_actions] softmax probabilities.
    """
    slab, layout = packed
    ns, nh, na = layout["ns"], layout["nh"], layout["na"]
    assert x.ndim == 2 and x.shape[1] == ns
    batch = x.shape[0]

    # Batch tile (lane axis): big enough that typical DQN batches are ONE grid step.
    # Tiles stay tiny (<~2.5 MiB incl. double-buffering), so even v7x's 32 MiB
    # default scoped VMEM is never a concern.
    tb = min(_round_up(block_batch, 128), _round_up(batch, 128))
    b_pad = _round_up(batch, tb)
    grid = (b_pad // tb,)

    x_t = x.T                                        # [ns, batch]  (one transpose)
    if b_pad != batch:
        x_t = jnp.pad(x_t, ((0, 0), (0, b_pad - batch)))

    flops = 2 * b_pad * (ns * nh + nh * nh + nh * na)
    bytes_accessed = (x_t.size * x_t.dtype.itemsize
                      + slab.size * slab.dtype.itemsize
                      + b_pad * na * 4)

    kernel = functools.partial(_qnet_kernel, **layout)
    out_t = pl.pallas_call(
        kernel,
        out_shape=jax.ShapeDtypeStruct((na, b_pad), jnp.float32),
        grid=grid,
        in_specs=[
            # x^T batch tiles stream (double-buffered by the Pallas pipeline).
            pl.BlockSpec((ns, tb), lambda i: (0, i)),
            # Parameter slab: constant block index -> loaded once, stays resident.
            pl.BlockSpec(slab.shape, lambda i: (0, 0)),
        ],
        # Lane-dense output block: last dim is a large multiple of 128.
        out_specs=pl.BlockSpec((na, tb), lambda i: (0, i)),
        compiler_params=pltpu.CompilerParams(
            dimension_semantics=("parallel",),  # shard batch tiles across TCs (v7x)
        ),
        cost_estimate=pl.CostEstimate(
            flops=flops,
            transcendentals=b_pad * na,
            bytes_accessed=bytes_accessed,
        ),
    )(x_t, slab)

    out = out_t.T                                    # [b_pad, na] (tiny transpose)
    return out[:batch]


def init_qnet_params(key, num_states, num_actions, hidden=32):
    """Matches QNet.__init__: weights ~ Normal(0, 0.5); biases use PyTorch's
    default Uniform(-1/sqrt(fan_in), 1/sqrt(fan_in)). Weights stored [in, out]."""
    k1, k2, k3, k4, k5, k6 = jax.random.split(key, 6)

    def w(k, fan_in, fan_out):
        return (0.5 * jax.random.normal(k, (fan_in, fan_out))).astype(jnp.float32)

    def b(k, fan_in, fan_out):
        bound = 1.0 / float(fan_in) ** 0.5
        return jax.random.uniform(
            k, (fan_out,), minval=-bound, maxval=bound
        ).astype(jnp.float32)

    return (
        w(k1, num_states, hidden), b(k2, num_states, hidden),
        w(k3, hidden, hidden), b(k4, hidden, hidden),
        w(k5, hidden, num_actions), b(k6, hidden, num_actions),
    )


def qnet_reference(x, params):
    """Pure-JAX reference for correctness checking."""
    w1, b1, w2, b2, w3, b3 = params
    h1 = jnp.maximum(x @ w1 + b1, 0.0)
    h2 = jnp.maximum(h1 @ w2 + b2, 0.0)
    return jax.nn.softmax(h2 @ w3 + b3, axis=-1)


if __name__ == "__main__":
    key = jax.random.PRNGKey(0)
    k_params, k_x1, k_x2 = jax.random.split(key, 3)

    # CartPole-ish sizes: 4 state dims, 2 actions.
    num_states, num_actions = 4, 2
    params = init_qnet_params(k_params, num_states, num_actions)

    packed_f32 = pack_qnet_params(params, jnp.float32)
    packed_bf16 = pack_qnet_params(params, jnp.bfloat16)

    # 1) Small batch (single grid step) — strict check against the reference.
    x_small = jax.random.normal(k_x1, (8, num_states), dtype=jnp.float32)
    out_small = jax.block_until_ready(qnet_forward(x_small, packed_f32))
    ref_small = qnet_reference(x_small, params)
    assert out_small.shape == (8, num_actions)
    assert jnp.allclose(out_small, ref_small, atol=1e-5, rtol=1e-5)
    assert jnp.allclose(jnp.sum(out_small, axis=-1), 1.0, atol=1e-5)

    # 2) Larger batch exercising the batch grid (2 parallel tiles of 512) and
    #    batch padding (1000 -> 1024, sliced back in the wrapper).
    x_big = jax.random.normal(k_x2, (1000, num_states), dtype=jnp.float32)
    out_big = jax.block_until_ready(qnet_forward(x_big, packed_f32, block_batch=512))
    ref_big = qnet_reference(x_big, params)
    assert out_big.shape == (1000, num_actions)
    assert jnp.allclose(out_big, ref_big, atol=1e-5, rtol=1e-5)
    assert jnp.allclose(jnp.sum(out_big, axis=-1), 1.0, atol=1e-5)

    # 3) bf16 parameter slab (half the param DMA); weights up-cast in-kernel so
    #    activations/epilogue stay f32.  Loose tolerance: weights are bf16-rounded.
    out_bf16 = jax.block_until_ready(qnet_forward(x_big, packed_bf16))
    assert out_bf16.shape == (1000, num_actions)
    assert jnp.allclose(out_bf16, ref_big, atol=5e-2)
    assert jnp.allclose(jnp.sum(out_bf16, axis=-1), 1.0, atol=1e-2)

    print("KERNEL_OK")
</pallas_src>

<mosaic_0001>
module attributes {stable_mosaic.version = 11 : i64} {
  func.func @_qnet_kernel(%arg0: i32, %arg1: memref<4x128xf32, #tpu.memory_space<vmem>>, %arg2: memref<80x128xf32, #tpu.memory_space<vmem>>, %arg3: memref<2x128xf32, #tpu.memory_space<vmem>>) attributes {dimension_semantics = [#tpu.dimension_semantics<parallel>], iteration_bounds = array<i64: 1>, scalar_prefetch = 0 : i64, scratch_operands = 0 : i64, tpu.core_type = #tpu.core_type<tc>, window_params = [{transform_indices = @transform_0, window_bounds = array<i64: 4, 128>}, {pipeline_mode = #tpu.pipeline_mode<synchronous>, transform_indices = @transform_1, window_bounds = array<i64: 80, 128>}, {transform_indices = @transform_2, window_bounds = array<i64: 2, 128>}]} {
    %c0 = arith.constant 0 : index
    %c0_0 = arith.constant 0 : index
    %0 = vector.load %arg1[%c0, %c0_0] : memref<4x128xf32, #tpu.memory_space<vmem>>, vector<4x128xf32>
    %c0_1 = arith.constant 0 : index
    %c127 = arith.constant 127 : index
    %1 = vector.load %arg2[%c0_1, %c127] : memref<80x128xf32, #tpu.memory_space<vmem>>, vector<32x1xf32>
    %cst = arith.constant 0.000000e+00 : f32
    %2 = vector.broadcast %cst : f32 to vector<32x128xf32>
    %c0_2 = arith.constant 0 : index
    %c0_3 = arith.constant 0 : index
    %3 = vector.load %arg2[%c0_2, %c0_3] : memref<80x128xf32, #tpu.memory_space<vmem>>, vector<32x1xf32>
    %4 = vector.extract_strided_slice %0 {offsets = [0, 0], sizes = [1, 128], strides = [1, 1]} : vector<4x128xf32> to vector<1x128xf32>
    %5 = vector.broadcast %3 : vector<32x1xf32> to vector<32x128xf32>
    %6 = vector.broadcast %4 : vector<1x128xf32> to vector<32x128xf32>
    %7 = arith.mulf %5, %6 : vector<32x128xf32>
    %8 = arith.addf %2, %7 : vector<32x128xf32>
    %c0_4 = arith.constant 0 : index
    %c1 = arith.constant 1 : index
    %9 = vector.load %arg2[%c0_4, %c1] : memref<80x128xf32, #tpu.memory_space<vmem>>, vector<32x1xf32>
    %10 = vector.extract_strided_slice %0 {offsets = [1, 0], sizes = [1, 128], strides = [1, 1]} : vector<4x128xf32> to vector<1x128xf32>
    %11 = vector.broadcast %9 : vector<32x1xf32> to vector<32x128xf32>
    %12 = vector.broadcast %10 : vector<1x128xf32> to vector<32x128xf32>
    %13 = arith.mulf %11, %12 : vector<32x128xf32>
    %14 = arith.addf %8, %13 : vector<32x128xf32>
    %c0_5 = arith.constant 0 : index
    %c2 = arith.constant 2 : index
    %15 = vector.load %arg2[%c0_5, %c2] : memref<80x128xf32, #tpu.memory_space<vmem>>, vector<32x1xf32>
    %16 = vector.extract_strided_slice %0 {offsets = [2, 0], sizes = [1, 128], strides = [1, 1]} : vector<4x128xf32> to vector<1x128xf32>
    %17 = vector.broadcast %15 : vector<32x1xf32> to vector<32x128xf32>
    %18 = vector.broadcast %16 : vector<1x128xf32> to vector<32x128xf32>
    %19 = arith.mulf %17, %18 : vector<32x128xf32>
    %20 = arith.addf %14, %19 : vector<32x128xf32>
    %c0_6 = arith.constant 0 : index
    %c3 = arith.constant 3 : index
    %21 = vector.load %arg2[%c0_6, %c3] : memref<80x128xf32, #tpu.memory_space<vmem>>, vector<32x1xf32>
    %22 = vector.extract_strided_slice %0 {offsets = [3, 0], sizes = [1, 128], strides = [1, 1]} : vector<4x128xf32> to vector<1x128xf32>
    %23 = vector.broadcast %21 : vector<32x1xf32> to vector<32x128xf32>
    %24 = vector.broadcast %22 : vector<1x128xf32> to vector<32x128xf32>
    %25 = arith.mulf %23, %24 : vector<32x128xf32>
    %26 = arith.addf %20, %25 : vector<32x128xf32>
    %27 = vector.broadcast %1 : vector<32x1xf32> to vector<32x128xf32>
    %28 = arith.addf %26, %27 : vector<32x128xf32>
    %cst_7 = arith.constant 0.000000e+00 : f32
    %29 = vector.broadcast %cst_7 : f32 to vector<32x128xf32>
    %30 = arith.maximumf %28, %29 : vector<32x128xf32>
    %c32 = arith.constant 32 : index
    %c0_8 = arith.constant 0 : index
    %31 = vector.load %arg2[%c32, %c0_8] : memref<80x128xf32, #tpu.memory_space<vmem>>, vector<32x32xf32>
    %c32_9 = arith.constant 32 : index
    %c127_10 = arith.constant 127 : index
    %32 = vector.load %arg2[%c32_9, %c127_10] : memref<80x128xf32, #tpu.memory_space<vmem>>, vector<32x1xf32>
    %cst_11 = arith.constant dense<0.000000e+00> : vector<32x128xf32>
    %33 = tpu.matmul %31, %30, %cst_11 {dimension_numbers = #tpu.dot_dimension_numbers<[1], [0], [0], [1], [0, 0, 1, 1], [], []>} : vector<32x32xf32>, vector<32x128xf32>, vector<32x128xf32> -> vector<32x128xf32>
    %34 = vector.broadcast %32 : vector<32x1xf32> to vector<32x128xf32>
    %35 = arith.addf %33, %34 : vector<32x128xf32>
    %cst_12 = arith.constant 0.000000e+00 : f32
    %36 = vector.broadcast %cst_12 : f32 to vector<32x128xf32>
    %37 = arith.maximumf %35, %36 : vector<32x128xf32>
    %c64 = arith.constant 64 : index
    %c0_13 = arith.constant 0 : index
    %38 = vector.load %arg2[%c64, %c0_13] : memref<80x128xf32, #tpu.memory_space<vmem>>, vector<8x32xf32>
    %c64_14 = arith.constant 64 : index
    %c127_15 = arith.constant 127 : index
    %39 = vector.load %arg2[%c64_14, %c127_15] : memref<80x128xf32, #tpu.memory_space<vmem>>, vector<2x1xf32>
    %cst_16 = arith.constant dense<0.000000e+00> : vector<8x128xf32>
    %40 = tpu.matmul %38, %37, %cst_16 {dimension_numbers = #tpu.dot_dimension_numbers<[1], [0], [0], [1], [0, 0, 1, 1], [], []>} : vector<8x32xf32>, vector<32x128xf32>, vector<8x128xf32> -> vector<8x128xf32>
    %41 = vector.extract_strided_slice %40 {offsets = [0, 0], sizes = [2, 128], strides = [1, 1]} : vector<8x128xf32> to vector<2x128xf32>
    %42 = vector.broadcast %39 : vector<2x1xf32> to vector<2x128xf32>
    %43 = arith.addf %41, %42 : vector<2x128xf32>
    %cst_17 = arith.constant dense<0xFF800000> : vector<128xf32>
    %44 = vector.multi_reduction <maximumf>, %43, %cst_17 [0] : vector<2x128xf32> to vector<128xf32>
    %45 = vector.shape_cast %44 : vector<128xf32> to vector<1x128xf32>
    %46 = vector.broadcast %45 : vector<1x128xf32> to vector<2x128xf32>
    %47 = arith.subf %43, %46 : vector<2x128xf32>
    %48 = math.exp %47 : vector<2x128xf32>
    %cst_18 = arith.constant dense<0.000000e+00> : vector<128xf32>
    %49 = vector.multi_reduction <add>, %48, %cst_18 [0] : vector<2x128xf32> to vector<128xf32>
    %50 = vector.shape_cast %49 : vector<128xf32> to vector<1x128xf32>
    %51 = vector.broadcast %50 : vector<1x128xf32> to vector<2x128xf32>
    %52 = arith.divf %48, %51 : vector<2x128xf32>
    %c0_19 = arith.constant 0 : index
    %c0_20 = arith.constant 0 : index
    %53 = vector.load %arg3[%c0_19, %c0_20] : memref<2x128xf32, #tpu.memory_space<vmem>>, vector<2x128xf32>
    tpu.vector_store %arg3[%c0_19, %c0_20], %52 {strides = array<i32>} : memref<2x128xf32, #tpu.memory_space<vmem>>, vector<2x128xf32>,
    return
  }
  func.func @transform_0(%arg0: i32) -> (i32, i32) {
    %c0_i32 = arith.constant 0 : i32
    %c0_i32_0 = arith.constant 0 : i32
    return %c0_i32, %arg0 : i32, i32
  }
  func.func @transform_1(%arg0: i32) -> (i32, i32) {
    %c0_i32 = arith.constant 0 : i32
    %c0_i32_0 = arith.constant 0 : i32
    %c0_i32_1 = arith.constant 0 : i32
    return %c0_i32, %c0_i32_0 : i32, i32
  }
  func.func @transform_2(%arg0: i32) -> (i32, i32) {
    %c0_i32 = arith.constant 0 : i32
    %c0_i32_0 = arith.constant 0 : i32
    return %c0_i32, %arg0 : i32, i32
  }
}

</mosaic_0001>

<llo_original>
// kernel: tpu_custom_call.1
$region0: #{tpu_custom_call.1}
  #allocation0 [shape = 'u32[]', space=smem, size = 0x4, offset = 0x4, fixed_abs, tag = 'smem constant byte address 0x4 - core index']
  #allocation1 [shape = 'u32[144,128]{1,0:T(1,128)}', space=vmem, size = 0x12000, scoped, tag = 'internal scratch']
  %s0 = inlined_call_operand.hbm [shape: f32[4,128], index: 0, kind: input, shape index: {}]
  %s1 = inlined_call_operand.hbm [shape: f32[80,128], index: 1, kind: input, shape index: {}]
  %s2 = inlined_call_operand.hbm [shape: f32[2,128], index: 2, kind: output, shape index: {}]
  %s3 = sld [smem:[#allocation0]]
  $region26: #{tpu_custom_call.1} parent=0
    _
  %s5 = ssub.s32 1, %s3
  %s6 = scalar_select 0, %s5, %s3
  $region1: #{tpu_custom_call.1} parent=0
    #allocation2 [shape = 'u8[2048]{0}', space=vmem, size = 0x800, scoped, tag = 'input window, operand 0, single buffered']
    #allocation3 [shape = 's32[1]{0}', space=sflag, size = 0x4, scoped, tag = 'scoped memory for tpu_custom_call.1']
    #allocation4 [shape = 's32[1]{0}', space=sflag, size = 0x4, scoped, tag = 'scoped memory for tpu_custom_call.1']
    #allocation5 [shape = 'u8[40960]{0}', space=vmem, size = 0xa000, scoped, tag = 'input window, operand 1, single buffered']
    #allocation6 [shape = 's32[1]{0}', space=sflag, size = 0x4, scoped, tag = 'scoped memory for tpu_custom_call.1']
    #allocation7 [shape = 'u8[1024]{0}', space=vmem, size = 0x400, scoped, tag = 'output window, operand 0, single buffered']
    %7 = vsyncpa [#allocation3], 0
    %8 = vsyncpa [#allocation6], 0
    %9 = vsyncpa [#allocation4], 0
    // Predicated region
    $region2: #{tpu_custom_call.1} parent=1 // pred_check
      _
    $region3: #{tpu_custom_call.1} parent=1 // pred_check_branch
      %11 = sbr.rel (0) target = $region5
    $region4: #{tpu_custom_call.1} parent=1 // pred_region
      %s13 = ssub.s32 64, 64
      %14 = vsyncadd [#allocation3], %s13
      %s16 = sshll.u32 [#allocation2], 4
      %s17 = int_to_ptr.vmem [resolvable:$true] %s16
      %19 = dma.hbm_to_vmem [thread:$0]  %s0, 64, %s17, [#allocation3]
    $region5: #{tpu_custom_call.1} parent=1 // pred_fallthru
      _
    // Predicated region
    $region6: #{tpu_custom_call.1} parent=1 // pred_check
      _
    $region7: #{tpu_custom_call.1} parent=1 // pred_check_branch
      %21 = sbr.rel (0) target = $region9
    $region8: #{tpu_custom_call.1} parent=1 // pred_region
      %s23 = ssub.s32 1280, 1280
      %24 = vsyncadd [#allocation6], %s23
      %s25 = sshll.u32 [#allocation5], 4
      %s26 = int_to_ptr.vmem [resolvable:$true] %s25
      %31 = dma.hbm_to_vmem [thread:$0]  %s1, 1280, %s26, [#allocation6], 128, 128, 8
    $region9: #{tpu_custom_call.1} parent=1 // pred_fallthru
      _
    // Predicated region
    $region10: #{tpu_custom_call.1} parent=1 // pred_check
      _
    $region11: #{tpu_custom_call.1} parent=1 // pred_check_branch
      %33 = sbr.rel (0) target = $region13
    $region12: #{tpu_custom_call.1} parent=1 // pred_region
      %34 = dma.done [#allocation3], 64
    $region13: #{tpu_custom_call.1} parent=1 // pred_fallthru
      _
    // Predicated region
    $region14: #{tpu_custom_call.1} parent=1 // pred_check
      _
    $region15: #{tpu_custom_call.1} parent=1 // pred_check_branch
      %36 = sbr.rel (0) target = $region17
    $region16: #{tpu_custom_call.1} parent=1 // pred_region
      %37 = dma.done [#allocation6], 1280
    $region17: #{tpu_custom_call.1} parent=1 // pred_fallthru
      _
    %v38 = vld [vmem:[#allocation2] sm:$0xf]
    %v39 = vld [vmem:[#allocation5] sm:$0xff]
    %v40 = vld [vmem:[#allocation5 + $0x8] sm:$0xff]
    %v41 = vld [vmem:[#allocation5 + $0x10] sm:$0xff]
    %v42 = vld [vmem:[#allocation5 + $0x18] sm:$0xff]
    %44 = vset.pattern.permute.xlu0 0
    %45 = vperm.xlu0 %44, %v39
    %v46 = vpop.permute.xlu0 %45
    %49 = vset.pattern.permute.xlu0 0
    %50 = vperm.xlu0 %49, %v40
    %v51 = vpop.permute.xlu0 %50
    %54 = vset.pattern.permute.xlu0 0
    %55 = vperm.xlu0 %54, %v41
    %v56 = vpop.permute.xlu0 %55
    %59 = vset.pattern.permute.xlu0 0
    %60 = vperm.xlu0 %59, %v42
    %v61 = vpop.permute.xlu0 %60
    %v63 = vlaneseq
    %v64 = vshrl.u32 %v63, 7
    %v65 = vsub.s32 0, %v64
    %v66 = vrot.slane %v38, %v65
    %v67 = vmul.f32 %v46, %v66
    %v68 = vmul.f32 %v51, %v66
    %v69 = vmul.f32 %v56, %v66
    %v70 = vmul.f32 %v61, %v66
    %v71 = vadd.f32 %v67, 0.0
    %v72 = vadd.f32 %v68, 0.0
    %v73 = vadd.f32 %v69, 0.0
    %v74 = vadd.f32 %v70, 0.0
    %75 = vset.pattern.permute.xlu0 1
    %76 = vperm.xlu0 %75, %v39
    %v77 = vpop.permute.xlu0 %76
    %79 = vset.pattern.permute.xlu0 1
    %80 = vperm.xlu0 %79, %v40
    %v81 = vpop.permute.xlu0 %80
    %83 = vset.pattern.permute.xlu0 1
    %84 = vperm.xlu0 %83, %v41
    %v85 = vpop.permute.xlu0 %84
    %87 = vset.pattern.permute.xlu0 1
    %88 = vperm.xlu0 %87, %v42
    %v89 = vpop.permute.xlu0 %88
    %v91 = vlaneseq
    %v92 = vshrl.u32 %v91, 7
    %v93 = vsub.s32 1, %v92
    %v94 = vrot.slane %v38, %v93
    %v95 = vmul.f32 %v77, %v94
    %v96 = vmul.f32 %v81, %v94
    %v97 = vmul.f32 %v85, %v94
    %v98 = vmul.f32 %v89, %v94
    %v99 = vadd.f32 %v71, %v95
    %v100 = vadd.f32 %v72, %v96
    %v101 = vadd.f32 %v73, %v97
    %v102 = vadd.f32 %v74, %v98
    %103 = vset.pattern.permute.xlu0 2
    %104 = vperm.xlu0 %103, %v39
    %v105 = vpop.permute.xlu0 %104
    %107 = vset.pattern.permute.xlu0 2
    %108 = vperm.xlu0 %107, %v40
    %v109 = vpop.permute.xlu0 %108
    %111 = vset.pattern.permute.xlu0 2
    %112 = vperm.xlu0 %111, %v41
    %v113 = vpop.permute.xlu0 %112
    %115 = vset.pattern.permute.xlu0 2
    %116 = vperm.xlu0 %115, %v42
    %v117 = vpop.permute.xlu0 %116
    %v119 = vlaneseq
    %v120 = vshrl.u32 %v119, 7
    %v121 = vsub.s32 2, %v120
    %v122 = vrot.slane %v38, %v121
    %v123 = vmul.f32 %v105, %v122
    %v124 = vmul.f32 %v109, %v122
    %v125 = vmul.f32 %v113, %v122
    %v126 = vmul.f32 %v117, %v122
    %v127 = vadd.f32 %v99, %v123
    %v128 = vadd.f32 %v100, %v124
    %v129 = vadd.f32 %v101, %v125
    %v130 = vadd.f32 %v102, %v126
    %131 = vset.pattern.permute.xlu0 3
    %132 = vperm.xlu0 %131, %v39
    %v133 = vpop.permute.xlu0 %132
    %135 = vset.pattern.permute.xlu0 3
    %136 = vperm.xlu0 %135, %v40
    %v137 = vpop.permute.xlu0 %136
    %139 = vset.pattern.permute.xlu0 3
    %140 = vperm.xlu0 %139, %v41
    %v141 = vpop.permute.xlu0 %140
    %143 = vset.pattern.permute.xlu0 3
    %144 = vperm.xlu0 %143, %v42
    %v145 = vpop.permute.xlu0 %144
    %v147 = vlaneseq
    %v148 = vshrl.u32 %v147, 7
    %v149 = vsub.s32 3, %v148
    %v150 = vrot.slane %v38, %v149
    %v151 = vmul.f32 %v133, %v150
    %v152 = vmul.f32 %v137, %v150
    %v153 = vmul.f32 %v141, %v150
    %v154 = vmul.f32 %v145, %v150
    %v155 = vadd.f32 %v127, %v151
    %v156 = vadd.f32 %v128, %v152
    %v157 = vadd.f32 %v129, %v153
    %v158 = vadd.f32 %v130, %v154
    %159 = vset.pattern.permute.xlu0 127
    %160 = vperm.xlu0 %159, %v39
    %v161 = vpop.permute.xlu0 %160
    %163 = vset.pattern.permute.xlu0 127
    %164 = vperm.xlu0 %163, %v40
    %v165 = vpop.permute.xlu0 %164
    %167 = vset.pattern.permute.xlu0 127
    %168 = vperm.xlu0 %167, %v41
    %v169 = vpop.permute.xlu0 %168
    %171 = vset.pattern.permute.xlu0 127
    %172 = vperm.xlu0 %171, %v42
    %v173 = vpop.permute.xlu0 %172
    %v175 = vadd.f32 %v155, %v161
    %v176 = vadd.f32 %v156, %v165
    %v177 = vadd.f32 %v157, %v169
    %v178 = vadd.f32 %v158, %v173
    %v179 = vmax.f32 %v175, 0.0
    %v180 = vmax.f32 %v176, 0.0
    %v181 = vmax.f32 %v177, 0.0
    %v182 = vmax.f32 %v178, 0.0
    %v183 = vld [vmem:[#allocation5 + $0x20] sm:$0xff]
    %v184 = vld [vmem:[#allocation5 + $0x28] sm:$0xff]
    %v185 = vld [vmem:[#allocation5 + $0x30] sm:$0xff]
    %v186 = vld [vmem:[#allocation5 + $0x38] sm:$0xff]
    %188 = vset.pattern.permute.xlu0 127
    %189 = vperm.xlu0 %188, %v183
    %v190 = vpop.permute.xlu0 %189
    %193 = vset.pattern.permute.xlu0 127
    %194 = vperm.xlu0 %193, %v184
    %v195 = vpop.permute.xlu0 %194
    %198 = vset.pattern.permute.xlu0 127
    %199 = vperm.xlu0 %198, %v185
    %v200 = vpop.permute.xlu0 %199
    %203 = vset.pattern.permute.xlu0 127
    %204 = vperm.xlu0 %203, %v186
    %v205 = vpop.permute.xlu0 %204
    %vm207 = vcmask 261120
    %v208 = vsel %vm207, %v183, 0
    %v210 = vsel %vm207, %v184, 0
    %v212 = vsel %vm207, %v185, 0
    %v214 = vsel %vm207, %v186, 0
    %216 = vmatprep.subr.mxu0 0.0
    %217 = vmatpush1.msra.mxu0 0.0
    %218 = vmatprep.subr.mxu0 0.0
    %219 = vmatpush1.msra.mxu0 0.0
    %220 = vmatprep.subr.mxu0 0.0
    %221 = vmatpush1.msra.mxu0 0.0
    %222 = vmatprep.subr.mxu0 0.0
    %223 = vmatpush1.msra.mxu0 0.0
    %224 = vmatprep.subr.mxu0 0.0
    %225 = vmatpush1.msra.mxu0 0.0
    %226 = vmatprep.subr.mxu0 0.0
    %227 = vmatpush1.msra.mxu0 0.0
    %228 = vmatprep.subr.mxu0 0.0
    %229 = vmatpush1.msra.mxu0 0.0
    %230 = vmatprep.subr.mxu0 0.0
    %231 = vmatpush1.msra.mxu0 0.0
    %232 = vmatprep.subr.mxu0 0.0
    %233 = vmatpush1.msra.mxu0 0.0
    %234 = vmatprep.subr.mxu0 0.0
    %235 = vmatpush1.msra.mxu0 0.0
    %236 = vmatprep.subr.mxu0 0.0
    %237 = vmatpush1.msra.mxu0 0.0
    %238 = vmatprep.subr.mxu0 0.0
    %239 = vmatpush1.msra.mxu0 0.0
    %240 = vmatprep.subr.mxu0 0.0
    %241 = vmatpush1.msra.mxu0 %v182
    %242 = vmatprep.subr.mxu0 0.0
    %243 = vmatpush1.msra.mxu0 %v181
    %244 = vmatprep.subr.mxu0 0.0
    %245 = vmatpush1.msra.mxu0 %v180
    %246 = vmatprep.subr.mxu0 0.0
    %247 = vmatpush1.msra.mxu0 %v179
    %248 = vmatprep.subr.mxu0 0.0
    %249 = vmatpush2.msra.mxu0 0.0
    %250 = vmatprep.subr.mxu0 0.0
    %251 = vmatpush2.msra.mxu0 0.0
    %252 = vmatprep.subr.mxu0 0.0
    %253 = vmatpush2.msra.mxu0 0.0
    %254 = vmatprep.subr.mxu0 0.0
    %255 = vmatpush2.msra.mxu0 0.0
    %256 = vmatprep.subr.mxu0 0.0
    %257 = vmatpush2.msra.mxu0 0.0
    %258 = vmatprep.subr.mxu0 0.0
    %259 = vmatpush2.msra.mxu0 0.0
    %260 = vmatprep.subr.mxu0 0.0
    %261 = vmatpush2.msra.mxu0 0.0
    %262 = vmatprep.subr.mxu0 0.0
    %263 = vmatpush2.msra.mxu0 0.0
    %264 = vmatprep.subr.mxu0 0.0
    %265 = vmatpush2.msra.mxu0 0.0
    %266 = vmatprep.subr.mxu0 0.0
    %267 = vmatpush2.msra.mxu0 0.0
    %268 = vmatprep.subr.mxu0 0.0
    %269 = vmatpush2.msra.mxu0 0.0
    %270 = vmatprep.subr.mxu0 0.0
    %271 = vmatpush2.msra.mxu0 0.0
    %272 = vmatprep.subr.mxu0 0.0
    %273 = vmatpush2.msra.mxu0 0.0
    %274 = vmatprep.subr.mxu0 0.0
    %275 = vmatpush2.msra.mxu0 0.0
    %276 = vmatprep.subr.mxu0 0.0
    %277 = vmatpush2.msra.mxu0 0.0
    %278 = vmatprep.subr.mxu0 0.0
    %279 = vmatpush2.msra.mxu0 0.0
    %280 = vmatprep.mubr.f32.mxu0 0.0
    %281 = vmatmul.mubr.f32.gmra.mxu0 %v208
    %v282 = vpop.f32.mrf.mxu0
    %v283 = vadd.f32 %v190, %v282
    %v284 = vpop.f32.mrf.mxu0
    %285 = vmatprep.mubr.f32.mxu0 0.0
    %286 = vmatmul.mubr.f32.gmra.mxu0 %v210
    %v287 = vpop.f32.mrf.mxu0
    %v288 = vadd.f32 %v195, %v287
    %v289 = vpop.f32.mrf.mxu0
    %290 = vmatprep.mubr.f32.mxu0 0.0
    %291 = vmatmul.mubr.f32.gmra.mxu0 %v212
    %v292 = vpop.f32.mrf.mxu0
    %v293 = vadd.f32 %v200, %v292
    %v294 = vpop.f32.mrf.mxu0
    %295 = vmatprep.mubr.f32.mxu0 0.0
    %296 = vmatmul.mubr.f32.gmra.mxu0 %v214
    %v297 = vpop.f32.mrf.mxu0
    %v298 = vadd.f32 %v205, %v297
    %v299 = vpop.f32.mrf.mxu0
    %300 = vdwg.mxu0
    %v301 = vmax.f32 %v283, 0.0
    %v302 = vmax.f32 %v288, 0.0
    %v303 = vmax.f32 %v293, 0.0
    %v304 = vmax.f32 %v298, 0.0
    %v305 = vld [vmem:[#allocation5 + $0x40] sm:$0xff]
    %v306 = vld [vmem:[#allocation5 + $0x40] sm:$0x3]
    %v308 = vsel %vm207, %v305, 0
    %310 = vmatprep.subr.mxu0 0.0
    %311 = vmatpush1.msra.mxu0 0.0
    %312 = vmatprep.subr.mxu0 0.0
    %313 = vmatpush1.msra.mxu0 0.0
    %314 = vmatprep.subr.mxu0 0.0
    %315 = vmatpush1.msra.mxu0 0.0
    %316 = vmatprep.subr.mxu0 0.0
    %317 = vmatpush1.msra.mxu0 0.0
    %318 = vmatprep.subr.mxu0 0.0
    %319 = vmatpush1.msra.mxu0 0.0
    %320 = vmatprep.subr.mxu0 0.0
    %321 = vmatpush1.msra.mxu0 0.0
    %322 = vmatprep.subr.mxu0 0.0
    %323 = vmatpush1.msra.mxu0 0.0
    %324 = vmatprep.subr.mxu0 0.0
    %325 = vmatpush1.msra.mxu0 0.0
    %326 = vmatprep.subr.mxu0 0.0
    %327 = vmatpush1.msra.mxu0 0.0
    %328 = vmatprep.subr.mxu0 0.0
    %329 = vmatpush1.msra.mxu0 0.0
    %330 = vmatprep.subr.mxu0 0.0
    %331 = vmatpush1.msra.mxu0 0.0
    %332 = vmatprep.subr.mxu0 0.0
    %333 = vmatpush1.msra.mxu0 0.0
    %334 = vmatprep.subr.mxu0 0.0
    %335 = vmatpush1.msra.mxu0 %v304
    %336 = vmatprep.subr.mxu0 0.0
    %337 = vmatpush1.msra.mxu0 %v303
    %338 = vmatprep.subr.mxu0 0.0
    %339 = vmatpush1.msra.mxu0 %v302
    %340 = vmatprep.subr.mxu0 0.0
    %341 = vmatpush1.msra.mxu0 %v301
    %342 = vmatprep.subr.mxu0 0.0
    %343 = vmatpush2.msra.mxu0 0.0
    %344 = vmatprep.subr.mxu0 0.0
    %345 = vmatpush2.msra.mxu0 0.0
    %346 = vmatprep.subr.mxu0 0.0
    %347 = vmatpush2.msra.mxu0 0.0
    %348 = vmatprep.subr.mxu0 0.0
    %349 = vmatpush2.msra.mxu0 0.0
    %350 = vmatprep.subr.mxu0 0.0
    %351 = vmatpush2.msra.mxu0 0.0
    %352 = vmatprep.subr.mxu0 0.0
    %353 = vmatpush2.msra.mxu0 0.0
    %354 = vmatprep.subr.mxu0 0.0
    %355 = vmatpush2.msra.mxu0 0.0
    %356 = vmatprep.subr.mxu0 0.0
    %357 = vmatpush2.msra.mxu0 0.0
    %358 = vmatprep.subr.mxu0 0.0
    %359 = vmatpush2.msra.mxu0 0.0
    %360 = vmatprep.subr.mxu0 0.0
    %361 = vmatpush2.msra.mxu0 0.0
    %362 = vmatprep.subr.mxu0 0.0
    %363 = vmatpush2.msra.mxu0 0.0
    %364 = vmatprep.subr.mxu0 0.0
    %365 = vmatpush2.msra.mxu0 0.0
    %366 = vmatprep.subr.mxu0 0.0
    %367 = vmatpush2.msra.mxu0 0.0
    %368 = vmatprep.subr.mxu0 0.0
    %369 = vmatpush2.msra.mxu0 0.0
    %370 = vmatprep.subr.mxu0 0.0
    %371 = vmatpush2.msra.mxu0 0.0
    %372 = vmatprep.subr.mxu0 0.0
    %373 = vmatpush2.msra.mxu0 0.0
    %374 = vmatprep.mubr.f32.mxu0 0.0
    %375 = vmatmul.mubr.f32.gmra.mxu0 %v308
    %v376 = vpop.f32.mrf.mxu0
    %v377 = vadd.f32 0.0, %v376
    %v378 = vpop.f32.mrf.mxu0
    %379 = vdwg.mxu0
    %381 = vset.pattern.permute.xlu0 127
    %382 = vperm.xlu0 %381, %v306
    %v383 = vpop.permute.xlu0 %382
    %v385 = vadd.f32 %v377, %v383
    %vm386 = vcmask 1041408
    %v387 = vsel %vm386, %v385, -inf
    %v388 = vrot.slane %v387, 4
    %v389 = vmax.f32 %v387, %v388
    %v390 = vrot.slane %v389, 2
    %v391 = vmax.f32 %v389, %v390
    %v392 = vrot.slane %v391, 1
    %v393 = vmax.f32 %v391, %v392
    %v394 = vsub.f32 %v385, %v393
    %v395 = vmul.f32 %v394, 1.442695
    %v396 = vpow.pop %v395
    %v397 = vsel %vm386, %v396, 0.0
    %v398 = vrot.slane %v397, 4
    %v399 = vadd.f32 %v397, %v398
    %v400 = vrot.slane %v399, 2
    %v401 = vadd.f32 %v399, %v400
    %v402 = vrot.slane %v401, 1
    %v403 = vadd.f32 %v401, %v402
    %v404 = vrcp.pop %v403
    %v405 = vmul.f32 %v396, %v404
    %406 = vst [vmem:[#allocation7] sm:$0x3] %v405
    // Predicated region
    $region18: #{tpu_custom_call.1} parent=1 // pred_check
      _
    $region19: #{tpu_custom_call.1} parent=1 // pred_check_branch
      %408 = sbr.rel (0) target = $region21
    $region20: #{tpu_custom_call.1} parent=1 // pred_region
      %s410 = ssub.s32 32, 32
      %411 = vsyncadd [#allocation4], %s410
      %s413 = sshll.u32 [#allocation7], 4
      %s414 = int_to_ptr.vmem [resolvable:$true] %s413
      %416 = dma.vmem_to_hbm [thread:$0]  %s414, 32, %s2, [#allocation4]
    $region21: #{tpu_custom_call.1} parent=1 // pred_fallthru
      _
    // Predicated region
    $region22: #{tpu_custom_call.1} parent=1 // pred_check
      _
    $region23: #{tpu_custom_call.1} parent=1 // pred_check_branch
      %418 = sbr.rel (0) target = $region25
    $region24: #{tpu_custom_call.1} parent=1 // pred_region
      %419 = dma.done [#allocation4], 32
    $region25: #{tpu_custom_call.1} parent=1 // pred_fallthru
      _
    %420 = vsyncpa [#allocation3], 1
    %421 = vsyncpa [#allocation6], 1
    %422 = vsyncpa [#allocation4], 1

</llo_original>
